<compile_context>
chip_gen: v5e
topology: v5e:2x2
jax: 0.10.0
libtpu: 0.0.40
codegen_flags: <defaults>
</compile_context>

<pallas_src>
import jax
import jax.numpy as jnp
from jax.experimental import pallas as pl
from jax.experimental.pallas import tpu as pltpu


PATCH = 4                  # stride-4 patch embedding -> 1/4 resolution (Segformer logits stride)
TEMPLATE_CH = 256          # Segformer-b0 decode head hidden size (classifier = Identity)
PLANE_CH = 96              # Embed2Plane(256, 96)
NPIX = PATCH * PATCH       # 16
KDIM = 3 * NPIX            # 48


def _round_up(x, m):
    return ((x + m - 1) // m) * m


def _choose_tm(T, B, tm_max):
    """Lane-aligned token tile; keep >= 2 total grid steps when possible (v7x megacore)."""
    tm = min(tm_max, _round_up(T, 128))
    if B * pl.cdiv(T, tm) < 2 and T > 128:
        tm = _round_up(pl.cdiv(T, 2), 128)
    return tm


# ----------------------------------------------------------------------------
# Fused kernel (token-minor layout):
#   x       = patches * broadcast(mask)            (48, tm)  bf16
#   plane^T = Wfused (96,48) @ x + bfused (96,1)   (96, tm)  f32 accumulate
# ----------------------------------------------------------------------------
def _encode_kernel(p_ref, m_ref, w_ref, b_ref, out_ref):
    m = m_ref[...]                                           # (16, tm) bf16
    mask48 = jnp.concatenate([m, m, m], axis=0)              # (48, tm) — per-channel broadcast
    x = p_ref[...] * mask48                                  # (48, tm) bf16
    plane = jnp.dot(w_ref[...], x,
                    preferred_element_type=jnp.float32)      # (96, tm) f32
    out_ref[...] = plane + b_ref[...]                        # bias broadcast along lanes


def encode_tokens(patches, maskp, wf, bf, *, tm_max=2048):
    """patches: (B, 48, T) bf16; maskp: (B, 16, T) bf16; wf: (96, 48) bf16; bf: (96, 1) f32.

    Returns (B, 96, Tp) f32 where Tp = T rounded up to a multiple of the token tile.
    """
    B, K, T = patches.shape
    N = wf.shape[0]

    tm = _choose_tm(T, B, tm_max)
    Tp = _round_up(T, tm)
    if Tp != T:
        patches = jnp.pad(patches, ((0, 0), (0, 0), (0, Tp - T)))
        maskp = jnp.pad(maskp, ((0, 0), (0, 0), (0, Tp - T)))

    flops = 2 * B * Tp * K * N + B * Tp * (K + N)
    bytes_accessed = (
        patches.size * patches.dtype.itemsize
        + maskp.size * maskp.dtype.itemsize
        + wf.size * wf.dtype.itemsize
        + bf.size * bf.dtype.itemsize
        + B * Tp * N * 4
    )

    return pl.pallas_call(
        _encode_kernel,
        out_shape=jax.ShapeDtypeStruct((B, N, Tp), jnp.float32),
        grid=(B, Tp // tm),
        in_specs=[
            pl.BlockSpec((None, K, tm), lambda b, t: (b, 0, t)),      # patches (bf16)
            pl.BlockSpec((None, NPIX, tm), lambda b, t: (b, 0, t)),   # mask (bf16)
            pl.BlockSpec((N, K), lambda b, t: (0, 0)),                # fused weight (bf16)
            pl.BlockSpec((N, 1), lambda b, t: (0, 0)),                # fused bias (f32)
        ],
        out_specs=pl.BlockSpec((None, N, tm), lambda b, t: (b, 0, t)),
        compiler_params=pltpu.CompilerParams(
            dimension_semantics=("parallel", "parallel"),
            vmem_limit_bytes=32 * 1024 * 1024,
        ),
        cost_estimate=pl.CostEstimate(
            flops=flops, transcendentals=0, bytes_accessed=bytes_accessed),
    )(patches, maskp, wf, bf)


# ----------------------------------------------------------------------------
# Parameter construction (deterministic, synthetic — no checkpoint load)
# ----------------------------------------------------------------------------
def init_params(key):
    k1, k2, k3, k4 = jax.random.split(key, 4)
    return {
        # Segformer feature-extractor normalization constants (ImageNet)
        "image_mean": jnp.array([0.485, 0.456, 0.406], jnp.float32),
        "image_std": jnp.array([0.229, 0.224, 0.225], jnp.float32),
        # template_net stand-in: 4x4/4 conv, 3 -> 256, expressed as a matmul
        "w1": 0.02 * jax.random.normal(k1, (KDIM, TEMPLATE_CH), jnp.float32),
        "b1": 0.02 * jax.random.normal(k2, (1, TEMPLATE_CH), jnp.float32),
        # Embed2Plane(256, 96): 1x1 conv, 256 -> 96
        "w2": 0.02 * jax.random.normal(k3, (TEMPLATE_CH, PLANE_CH), jnp.float32),
        "b2": 0.02 * jax.random.normal(k4, (1, PLANE_CH), jnp.float32),
    }


# ----------------------------------------------------------------------------
# Forward: wrapper does f32 normalization + layout gather + frozen-weight fusion only
# ----------------------------------------------------------------------------
@jax.jit
def canonical_encoder_forward(params, img_src, src_mask):
    B, C, H, W = img_src.shape
    Hp, Wp = H // PATCH, W // PATCH
    T = Hp * Wp

    # Normalize in f32 BEFORE the bf16 cast (fuses into the XLA layout gather).
    mean = params["image_mean"].reshape(1, C, 1, 1)
    std = params["image_std"].reshape(1, C, 1, 1)
    im = ((img_src + 1.0) * 0.5 - mean) / std

    # Token-minor patch gather: (B, 48, T) with row order (c, ph, pw).
    patches = im.reshape(B, C, Hp, PATCH, Wp, PATCH).transpose(0, 1, 3, 5, 2, 4)
    patches = patches.reshape(B, KDIM, T).astype(jnp.bfloat16)
    # Mask gathered as (B, 16, T); broadcast to the 3 channels happens in-kernel.
    maskp = src_mask.reshape(B, Hp, PATCH, Wp, PATCH).transpose(0, 2, 4, 1, 3)
    maskp = maskp.reshape(B, NPIX, T).astype(jnp.bfloat16)

    # Exact fusion of the two frozen linear layers (no nonlinearity between them).
    wf = (params["w1"] @ params["w2"]).T.astype(jnp.bfloat16)                    # (96, 48)
    bfused = (params["b1"] @ params["w2"] + params["b2"]
              ).reshape(PLANE_CH, 1).astype(jnp.float32)                         # (96, 1)

    # Fused mask + projection Pallas kernel; output already channel-major (B, 96, Tp).
    plane = encode_tokens(patches, maskp, wf, bfused)

    if plane.shape[-1] != T:        # drop token padding (only when T not tile-aligned)
        plane = plane[:, :, :T]
    canonical_plane = plane.reshape(B, PLANE_CH, Hp, Wp)   # free reshape, already NCHW

    # freeze_cano -> detach
    return jax.lax.stop_gradient(canonical_plane)


# ----------------------------------------------------------------------------
# Pure-JAX f32 reference for correctness checking (unfused, two matmuls)
# ----------------------------------------------------------------------------
def reference_forward(params, img_src, src_mask):
    B, C, H, W = img_src.shape
    Hp, Wp = H // PATCH, W // PATCH
    mean = params["image_mean"].reshape(1, C, 1, 1)
    std = params["image_std"].reshape(1, C, 1, 1)
    im = (((img_src + 1.0) * 0.5) - mean) / std * src_mask
    patches = im.reshape(B, C, Hp, PATCH, Wp, PATCH).transpose(0, 2, 4, 1, 3, 5)
    patches = patches.reshape(B * Hp * Wp, C * PATCH * PATCH)
    feat = patches @ params["w1"] + params["b1"]
    plane = feat @ params["w2"] + params["b2"]
    return plane.reshape(B, Hp, Wp, PLANE_CH).transpose(0, 3, 1, 2)


if __name__ == "__main__":
    key = jax.random.PRNGKey(0)
    kp, kx, km = jax.random.split(key, 3)

    params = init_params(kp)

    B, C, H, W = 2, 3, 16, 16
    img_src = jax.random.uniform(kx, (B, C, H, W), jnp.float32, -1.0, 1.0)
    src_mask = (jax.random.uniform(km, (B, 1, H, W), jnp.float32) > 0.3).astype(jnp.float32)

    out = canonical_encoder_forward(params, img_src, src_mask)
    out = jax.block_until_ready(out)

    ref = reference_forward(params, img_src, src_mask)
    assert out.shape == (B, PLANE_CH, H // PATCH, W // PATCH), out.shape
    # bf16 matmul inputs with f32 accumulation (+ exact w1@w2 fusion) vs f32 reference.
    assert jnp.allclose(out, ref, atol=2e-2, rtol=2e-2), "mismatch vs reference"

    print("KERNEL_OK")
</pallas_src>

<mosaic_0001>
module attributes {stable_mosaic.version = 11 : i64} {
  func.func @_encode_kernel(%arg0: i32, %arg1: i32, %arg2: memref<1x48x128xbf16, #tpu.memory_space<vmem>>, %arg3: memref<1x16x128xbf16, #tpu.memory_space<vmem>>, %arg4: memref<96x48xbf16, #tpu.memory_space<vmem>>, %arg5: memref<96x1xf32, #tpu.memory_space<vmem>>, %arg6: memref<1x96x128xf32, #tpu.memory_space<vmem>>) attributes {dimension_semantics = [#tpu.dimension_semantics<parallel>, #tpu.dimension_semantics<parallel>], iteration_bounds = array<i64: 2, 1>, scalar_prefetch = 0 : i64, scratch_operands = 0 : i64, tpu.core_type = #tpu.core_type<tc>, window_params = [{transform_indices = @transform_0, window_bounds = array<i64: 1, 48, 128>}, {transform_indices = @transform_1, window_bounds = array<i64: 1, 16, 128>}, {pipeline_mode = #tpu.pipeline_mode<synchronous>, transform_indices = @transform_2, window_bounds = array<i64: 96, 48>}, {pipeline_mode = #tpu.pipeline_mode<synchronous>, transform_indices = @transform_3, window_bounds = array<i64: 96, 1>}, {transform_indices = @transform_4, window_bounds = array<i64: 1, 96, 128>}]} {
    %c0 = arith.constant 0 : index
    %c0_0 = arith.constant 0 : index
    %c0_1 = arith.constant 0 : index
    %0 = vector.load %arg3[%c0, %c0_0, %c0_1] : memref<1x16x128xbf16, #tpu.memory_space<vmem>>, vector<1x16x128xbf16>
    %1 = vector.shape_cast %0 : vector<1x16x128xbf16> to vector<16x128xbf16>
    %2 = tpu.concatenate %1, %1, %1 in 0 : vector<16x128xbf16>, vector<16x128xbf16>, vector<16x128xbf16> -> vector<48x128xbf16>
    %c0_2 = arith.constant 0 : index
    %c0_3 = arith.constant 0 : index
    %c0_4 = arith.constant 0 : index
    %3 = vector.load %arg2[%c0_2, %c0_3, %c0_4] : memref<1x48x128xbf16, #tpu.memory_space<vmem>>, vector<1x48x128xbf16>
    %4 = vector.shape_cast %3 : vector<1x48x128xbf16> to vector<48x128xbf16>
    %5 = arith.mulf %4, %2 : vector<48x128xbf16>
    %c0_5 = arith.constant 0 : index
    %c0_6 = arith.constant 0 : index
    %6 = vector.load %arg4[%c0_5, %c0_6] : memref<96x48xbf16, #tpu.memory_space<vmem>>, vector<96x48xbf16>
    %cst = arith.constant dense<0.000000e+00> : vector<96x128xf32>
    %7 = tpu.matmul %6, %5, %cst {dimension_numbers = #tpu.dot_dimension_numbers<[1], [0], [0], [1], [0, 0, 1, 1], [], []>} : vector<96x48xbf16>, vector<48x128xbf16>, vector<96x128xf32> -> vector<96x128xf32>
    %c0_7 = arith.constant 0 : index
    %c0_8 = arith.constant 0 : index
    %8 = vector.load %arg5[%c0_7, %c0_8] : memref<96x1xf32, #tpu.memory_space<vmem>>, vector<96x1xf32>
    %9 = vector.broadcast %8 : vector<96x1xf32> to vector<96x128xf32>
    %10 = arith.addf %7, %9 : vector<96x128xf32>
    %c0_9 = arith.constant 0 : index
    %c0_10 = arith.constant 0 : index
    %c0_11 = arith.constant 0 : index
    %11 = vector.load %arg6[%c0_9, %c0_10, %c0_11] : memref<1x96x128xf32, #tpu.memory_space<vmem>>, vector<1x96x128xf32>
    %12 = vector.shape_cast %11 : vector<1x96x128xf32> to vector<96x128xf32>
    %13 = vector.shape_cast %10 : vector<96x128xf32> to vector<1x96x128xf32>
    tpu.vector_store %arg6[%c0_9, %c0_10, %c0_11], %13 {strides = array<i32>} : memref<1x96x128xf32, #tpu.memory_space<vmem>>, vector<1x96x128xf32>,
    return
  }
  func.func @transform_0(%arg0: i32, %arg1: i32) -> (i32, i32, i32) {
    %c0_i32 = arith.constant 0 : i32
    %c0_i32_0 = arith.constant 0 : i32
    return %arg0, %c0_i32, %arg1 : i32, i32, i32
  }
  func.func @transform_1(%arg0: i32, %arg1: i32) -> (i32, i32, i32) {
    %c0_i32 = arith.constant 0 : i32
    %c0_i32_0 = arith.constant 0 : i32
    return %arg0, %c0_i32, %arg1 : i32, i32, i32
  }
  func.func @transform_2(%arg0: i32, %arg1: i32) -> (i32, i32) {
    %c0_i32 = arith.constant 0 : i32
    %c0_i32_0 = arith.constant 0 : i32
    %c0_i32_1 = arith.constant 0 : i32
    return %c0_i32, %c0_i32_0 : i32, i32
  }
  func.func @transform_3(%arg0: i32, %arg1: i32) -> (i32, i32) {
    %c0_i32 = arith.constant 0 : i32
    %c0_i32_0 = arith.constant 0 : i32
    %c0_i32_1 = arith.constant 0 : i32
    return %c0_i32, %c0_i32_0 : i32, i32
  }
  func.func @transform_4(%arg0: i32, %arg1: i32) -> (i32, i32, i32) {
    %c0_i32 = arith.constant 0 : i32
    %c0_i32_0 = arith.constant 0 : i32
    return %arg0, %c0_i32, %arg1 : i32, i32, i32
  }
}

</mosaic_0001>

<llo_original>
// kernel: canonical_encoder_forward.1
$region0: #{canonical_encoder_forward.1}
  #allocation0 [shape = 'u32[]', space=smem, size = 0x4, offset = 0x4, fixed_abs, tag = 'smem constant byte address 0x4 - core index']
  #allocation1 [shape = 'u32[72,128]{1,0:T(1,128)}', space=vmem, size = 0x9000, scoped, tag = 'internal scratch']
  %s0 = inlined_call_operand.vmem [shape: bf16[2,48,128], index: 0, kind: input, shape index: {}]
  %s1 = inlined_call_operand.vmem [shape: bf16[2,16,128], index: 1, kind: input, shape index: {}]
  %s2 = inlined_call_operand.vmem [shape: bf16[96,48], index: 2, kind: input, shape index: {}]
  %s3 = inlined_call_operand.vmem [shape: f32[96,1], index: 3, kind: input, shape index: {}]
  %s4 = inlined_call_operand.vmem [shape: f32[2,96,128], index: 4, kind: output, shape index: {}]
  %s5 = sld [smem:[#allocation0]]
  $region49: #{canonical_encoder_forward.1} parent=0
    _
  %s7 = ssub.s32 1, %s5
  %s8 = scalar_select 0, %s7, %s5
  loop: start=0, step=1, limit=4
  $region2: #{canonical_encoder_forward.1} parent=0 // loop_pre_header
    _
  $region3: #{canonical_encoder_forward.1} parent=0 // loop_header
    %s10 = sphi 0, %s14
    %p11 = scmp.ge.s32.totalorder %s10, 4
    %s17 = sphi 0, %s29
    %s18 = sphi 0, %s25
    %s19 = sphi 0, %s17
    %s20 = sphi 0, %s18
    %s21 = sphi 0, %s19
    %s22 = sphi 0, %s20
    %s34 = sphi 0, %s36
    %s37 = sphi 0, %s34
    %s38 = sphi 0, %s37
    %s54 = sphi 0, %s38
    %s62 = sphi 0, %s64
    %s65 = sphi 0, %s62
    %s66 = sphi 0, %s65
    %s82 = sphi 0, %s66
    %s86 = sphi 0, %s86
    %s88 = sphi 0, %s86
    %s89 = sphi 0, %s88
    %s103 = sphi 0, %s89
    %s107 = sphi 0, %s107
    %s109 = sphi 0, %s107
    %s110 = sphi 0, %s109
    %s124 = sphi 0, %s110
    %s132 = sphi 0, %s134
    %s135 = sphi 0, %s132
    %s136 = sphi 0, %s135
    %s152 = sphi 0, %s136
  $region4: #{canonical_encoder_forward.1} parent=0 // loop_header_branch
    %13 = sbr.rel (%p11) target = $region8
  $region5: #{canonical_encoder_forward.1} parent=0 // loop_body
    %s15 = ssub.s32 %s10, 1
    %s16 = ssub.s32 %s10, 2
    %s23 = sadd.s32 1, %s18
    %p24 = scmp.ge.s32.totalorder %s23, 1
    %s25 = scalar_select %p24, 0, %s23
    %s26 = sadd.s32 1, %s17
    %s27 = scalar_select %p24, %s26, %s17
    %p28 = scmp.ge.s32.totalorder %s27, 2
    %s29 = scalar_select %p28, 0, %s27
    %s30 = ssub.s32 %s17, %s29
    %s31 = ssub.s32 %s18, %s25
    %s32 = sor.u32 %s30, %s31
    %p33 = scmp.eq.s32.totalorder %s32, 0
    %s35 = sadd.s32 %s34, 1
    %s36 = scalar_select %p33, %s34, %s35
    %p39 = pneg %p33
    %p40 = scmp.eq.s32.totalorder %s10, 1
    %p41 = por %p39, %p40
    %p42 = scmp.ne.s32.totalorder %s34, %s37
    %p43 = scmp.eq.s32.totalorder %s10, 0
    %p44 = por %p42, %p43
    %p45 = scmp.ne.s32.totalorder %s34, %s37
    %p46 = scmp.eq.s32.totalorder %s15, 1
    %p47 = por %p45, %p46
    %p48 = scmp.ne.s32.totalorder %s37, %s38
    %p49 = scmp.eq.s32.totalorder %s15, 0
    %p50 = por %p48, %p49
    %p51 = scmp.ne.s32.totalorder %s37, %s38
    %p52 = scmp.eq.s32.totalorder %s16, 1
    %p53 = por %p51, %p52
    %p55 = scmp.ne.s32.totalorder %s38, %s54
    %p56 = scmp.eq.s32.totalorder %s16, 0
    %p57 = por %p55, %p56
    %s58 = ssub.s32 %s17, %s29
    %s59 = ssub.s32 %s18, %s25
    %s60 = sor.u32 %s58, %s59
    %p61 = scmp.eq.s32.totalorder %s60, 0
    %s63 = sadd.s32 %s62, 1
    %s64 = scalar_select %p61, %s62, %s63
    %p67 = pneg %p61
    %p68 = scmp.eq.s32.totalorder %s10, 1
    %p69 = por %p67, %p68
    %p70 = scmp.ne.s32.totalorder %s62, %s65
    %p71 = scmp.eq.s32.totalorder %s10, 0
    %p72 = por %p70, %p71
    %p73 = scmp.ne.s32.totalorder %s62, %s65
    %p74 = scmp.eq.s32.totalorder %s15, 1
    %p75 = por %p73, %p74
    %p76 = scmp.ne.s32.totalorder %s65, %s66
    %p77 = scmp.eq.s32.totalorder %s15, 0
    %p78 = por %p76, %p77
    %p79 = scmp.ne.s32.totalorder %s65, %s66
    %p80 = scmp.eq.s32.totalorder %s16, 1
    %p81 = por %p79, %p80
    %p83 = scmp.ne.s32.totalorder %s66, %s82
    %p84 = scmp.eq.s32.totalorder %s16, 0
    %p85 = por %p83, %p84
    %s87 = sadd.s32 %s86, 1
    %p90 = scmp.eq.s32.totalorder %s10, 1
    %p91 = scmp.ne.s32.totalorder %s86, %s88
    %p92 = scmp.eq.s32.totalorder %s10, 0
    %p93 = por %p91, %p92
    %p94 = scmp.ne.s32.totalorder %s86, %s88
    %p95 = scmp.eq.s32.totalorder %s15, 1
    %p96 = por %p94, %p95
    %p97 = scmp.ne.s32.totalorder %s88, %s89
    %p98 = scmp.eq.s32.totalorder %s15, 0
    %p99 = por %p97, %p98
    %p100 = scmp.ne.s32.totalorder %s88, %s89
    %p101 = scmp.eq.s32.totalorder %s16, 1
    %p102 = por %p100, %p101
    %p104 = scmp.ne.s32.totalorder %s89, %s103
    %p105 = scmp.eq.s32.totalorder %s16, 0
    %p106 = por %p104, %p105
    %s108 = sadd.s32 %s107, 1
    %p111 = scmp.eq.s32.totalorder %s10, 1
    %p112 = scmp.ne.s32.totalorder %s107, %s109
    %p113 = scmp.eq.s32.totalorder %s10, 0
    %p114 = por %p112, %p113
    %p115 = scmp.ne.s32.totalorder %s107, %s109
    %p116 = scmp.eq.s32.totalorder %s15, 1
    %p117 = por %p115, %p116
    %p118 = scmp.ne.s32.totalorder %s109, %s110
    %p119 = scmp.eq.s32.totalorder %s15, 0
    %p120 = por %p118, %p119
    %p121 = scmp.ne.s32.totalorder %s109, %s110
    %p122 = scmp.eq.s32.totalorder %s16, 1
    %p123 = por %p121, %p122
    %p125 = scmp.ne.s32.totalorder %s110, %s124
    %p126 = scmp.eq.s32.totalorder %s16, 0
    %p127 = por %p125, %p126
    %s128 = ssub.s32 %s17, %s29
    %s129 = ssub.s32 %s18, %s25
    %s130 = sor.u32 %s128, %s129
    %p131 = scmp.eq.s32.totalorder %s130, 0
    %s133 = sadd.s32 %s132, 1
    %s134 = scalar_select %p131, %s132, %s133
    %p137 = pneg %p131
    %p138 = scmp.eq.s32.totalorder %s10, 1
    %p139 = por %p137, %p138
    %p140 = scmp.ne.s32.totalorder %s132, %s135
    %p141 = scmp.eq.s32.totalorder %s10, 0
    %p142 = por %p140, %p141
    %p143 = scmp.ne.s32.totalorder %s132, %s135
    %p144 = scmp.eq.s32.totalorder %s15, 1
    %p145 = por %p143, %p144
    %p146 = scmp.ne.s32.totalorder %s135, %s136
    %p147 = scmp.eq.s32.totalorder %s15, 0
    %p148 = por %p146, %p147
    %p149 = scmp.ne.s32.totalorder %s135, %s136
    %p150 = scmp.eq.s32.totalorder %s16, 1
    %p151 = por %p149, %p150
    %p153 = scmp.ne.s32.totalorder %s136, %s152
    %p154 = scmp.eq.s32.totalorder %s16, 0
    %p155 = por %p153, %p154
    %p156 = scmp.le.s32.totalorder 1, %s10
    %p157 = scmp.lt.s32.totalorder %s10, 3
    %p158 = pnand %p156, %p157
    %p159 = pneg %p158
    // Predicated region
    $region9: #{canonical_encoder_forward.1} parent=5 // pred_check
      _
    $region10: #{canonical_encoder_forward.1} parent=5 // pred_check_branch
      %161 = sbr.rel (%p158) target = $region12
    $region11: #{canonical_encoder_forward.1} parent=5 // pred_region
      %s162 = ssub.s32 %s10, 1
      // Predicated region
      $region13: #{canonical_encoder_forward.1} parent=11 // pred_check
        %p163 = pneg %p99
      $region14: #{canonical_encoder_forward.1} parent=11 // pred_check_branch
        %165 = sbr.rel (%p163) target = $region16
      $region15: #{canonical_encoder_forward.1} parent=11 // pred_region
        _
      $region16: #{canonical_encoder_forward.1} parent=11 // pred_fallthru
        _
      // Predicated region
      $region17: #{canonical_encoder_forward.1} parent=11 // pred_check
        %p166 = pneg %p120
      $region18: #{canonical_encoder_forward.1} parent=11 // pred_check_branch
        %168 = sbr.rel (%p166) target = $region20
      $region19: #{canonical_encoder_forward.1} parent=11 // pred_region
        _
      $region20: #{canonical_encoder_forward.1} parent=11 // pred_fallthru
        _
    $region12: #{canonical_encoder_forward.1} parent=5 // pred_fallthru
      _
    %p169 = scmp.lt.s32.totalorder %s10, 2
    // Predicated region
    $region21: #{canonical_encoder_forward.1} parent=5 // pred_check
      %p170 = pneg %p169
    $region22: #{canonical_encoder_forward.1} parent=5 // pred_check_branch
      %172 = sbr.rel (%p170) target = $region24
    $region23: #{canonical_encoder_forward.1} parent=5 // pred_region
      // Predicated region
      $region25: #{canonical_encoder_forward.1} parent=23 // pred_check
        %p173 = pneg %p44
      $region26: #{canonical_encoder_forward.1} parent=23 // pred_check_branch
        %175 = sbr.rel (%p173) target = $region28
      $region27: #{canonical_encoder_forward.1} parent=23 // pred_region
        %p176 = scmp.lt.s32.totalorder %s17, 1
        %s177 = scalar_select %p176, %s17, 1
        %p178 = scmp.lt.s32.totalorder %s18, 0
        %s179 = scalar_select %p178, %s18, 0
        %s180 = smul.addr %s177, 6
        %s181 = sadd.s32 %s179, %s180
        %s182 = smul.addr %s181, 4
        %s183 = scalar_lea.vmem %s0, %s182
      $region28: #{canonical_encoder_forward.1} parent=23 // pred_fallthru
        _
      // Predicated region
      $region29: #{canonical_encoder_forward.1} parent=23 // pred_check
        %p184 = pneg %p72
      $region30: #{canonical_encoder_forward.1} parent=23 // pred_check_branch
        %186 = sbr.rel (%p184) target = $region32
      $region31: #{canonical_encoder_forward.1} parent=23 // pred_region
        %p187 = scmp.lt.s32.totalorder %s17, 1
        %s188 = scalar_select %p187, %s17, 1
        %p189 = scmp.lt.s32.totalorder %s18, 0
        %s190 = scalar_select %p189, %s18, 0
        %s191 = smul.addr %s188, 2
        %s192 = sadd.s32 %s190, %s191
        %s193 = smul.addr %s192, 4
        %s194 = scalar_lea.vmem %s1, %s193
      $region32: #{canonical_encoder_forward.1} parent=23 // pred_fallthru
        _
    $region24: #{canonical_encoder_forward.1} parent=5 // pred_fallthru
      _
    %p195 = scmp.le.s32.totalorder 1, %s10
    %p196 = scmp.lt.s32.totalorder %s10, 3
    %p197 = pnand %p195, %p196
    %p198 = pneg %p197
    // Predicated region
    $region33: #{canonical_encoder_forward.1} parent=5 // pred_check
      _
    $region34: #{canonical_encoder_forward.1} parent=5 // pred_check_branch
      %200 = sbr.rel (%p197) target = $region36
    $region35: #{canonical_encoder_forward.1} parent=5 // pred_region
      %s201 = ssub.s32 %s10, 1
      %p202 = scmp.lt.s32.totalorder %s19, 1
      %s203 = scalar_select %p202, %s19, 1
      %p204 = scmp.lt.s32.totalorder %s20, 0
      %s205 = scalar_select %p204, %s20, 0
      %s206 = smul.addr %s203, 6
      %s207 = sadd.s32 %s205, %s206
      %s208 = smul.addr %s207, 4
      %s209 = scalar_lea.vmem %s0, %s208
      %p210 = pneg %p50
      %p211 = pneg %p47
      %p212 = scmp.lt.s32.totalorder %s19, 1
      %s213 = scalar_select %p212, %s19, 1
      %p214 = scmp.lt.s32.totalorder %s20, 0
      %s215 = scalar_select %p214, %s20, 0
      %s216 = smul.addr %s213, 2
      %s217 = sadd.s32 %s215, %s216
      %s218 = smul.addr %s217, 4
      %s219 = scalar_lea.vmem %s1, %s218
      %p220 = pneg %p78
      %p221 = pneg %p75
      %p222 = pneg %p99
      %p223 = pneg %p96
      %p224 = pneg %p120
      %p225 = pneg %p117
      %p226 = pneg %p148
      %p227 = pneg %p145
      %p228 = scmp.lt.s32.totalorder %s19, 1
      %s229 = scalar_select %p228, %s19, 1
      %p230 = scmp.lt.s32.totalorder %s20, 0
      %s231 = scalar_select %p230, %s20, 0
      %s232 = smul.addr %s229, 12
      %s233 = sadd.s32 %s231, %s232
      %s234 = smul.addr %s233, 8
      %s235 = scalar_lea.vmem %s4, %s234
      %p236 = scmp.lt.s32.totalorder %s19, 1
      %s237 = scalar_select %p236, %s19, 1
      %p238 = scmp.lt.s32.totalorder %s20, 0
      %s239 = scalar_select %p238, %s20, 0
      %s240 = smul.addr %s237, 6
      %s241 = sadd.s32 %s239, %s240
      %s242 = smul.addr %s241, 4
      %s243 = scalar_lea.vmem %s0, %s242
      %p244 = scmp.lt.s32.totalorder %s19, 1
      %s245 = scalar_select %p244, %s19, 1
      %p246 = scmp.lt.s32.totalorder %s20, 0
      %s247 = scalar_select %p246, %s20, 0
      %s248 = smul.addr %s245, 2
      %s249 = sadd.s32 %s247, %s248
      %s250 = smul.addr %s249, 4
      %s251 = scalar_lea.vmem %s1, %s250
      %p252 = scmp.lt.s32.totalorder %s19, 1
      %s253 = scalar_select %p252, %s19, 1
      %p254 = scmp.lt.s32.totalorder %s20, 0
      %s255 = scalar_select %p254, %s20, 0
      %s256 = smul.addr %s253, 12
      %s257 = sadd.s32 %s255, %s256
      %s258 = smul.addr %s257, 8
      %s259 = scalar_lea.vmem %s4, %s258
      %v261 = vld [vmem:[%s251] sm:$0xf]
      %v262 = vld [vmem:[%s251 + $0x4] sm:$0xf]
      %v265 = vunpack.c.l.b16 %v261
      %v266 = vunpack.c.l.b16 %v262
      %v267 = vpack.c.b16 %v266, %v265
      %v269 = vld [vmem:[%s243] sm:$0xf]
      %v270 = vld [vmem:[%s243 + $0x4] sm:$0xf]
      %v271 = vld [vmem:[%s243 + $0x8] sm:$0xf]
      %v272 = vld [vmem:[%s243 + $0xc] sm:$0xf]
      %v273 = vld [vmem:[%s243 + $0x10] sm:$0xf]
      %v274 = vld [vmem:[%s243 + $0x14] sm:$0xf]
      %v275 = vunpack.c.l.bf16 %v269
      %v276 = vunpack.c.l.bf16 %v270
      %v277 = vunpack.c.l.bf16 %v271
      %v278 = vunpack.c.l.bf16 %v272
      %v279 = vunpack.c.l.bf16 %v273
      %v280 = vunpack.c.l.bf16 %v274
      %v281 = vunpack.c.l.bf16 %v267
      %v282 = vunpack.c.h.bf16 %v267
      %v283 = vmul.f32 %v275, %v281
      %v284 = vmul.f32 %v276, %v282
      %v285 = vmul.f32 %v277, %v281
      %v286 = vmul.f32 %v278, %v282
      %v287 = vmul.f32 %v279, %v281
      %v288 = vmul.f32 %v280, %v282
      %v289 = vpack.c.bf16 %v284, %v283
      %v290 = vpack.c.bf16 %v286, %v285
      %v291 = vpack.c.bf16 %v288, %v287
      %v292 = vld [vmem:[%s2] sm:$0xf]
      %v293 = vld [vmem:[%s2 + $0x4] sm:$0xf]
      %v294 = vld [vmem:[%s2 + $0x8] sm:$0xf]
      %v295 = vld [vmem:[%s2 + $0xc] sm:$0xf]
      %v296 = vld [vmem:[%s2 + $0x10] sm:$0xf]
      %v297 = vld [vmem:[%s2 + $0x14] sm:$0xf]
      %v298 = vld [vmem:[%s2 + $0x18] sm:$0xf]
      %v299 = vld [vmem:[%s2 + $0x1c] sm:$0xf]
      %v300 = vld [vmem:[%s2 + $0x20] sm:$0xf]
      %v301 = vld [vmem:[%s2 + $0x24] sm:$0xf]
      %v302 = vld [vmem:[%s2 + $0x28] sm:$0xf]
      %v303 = vld [vmem:[%s2 + $0x2c] sm:$0xf]
      %v304 = vld [vmem:[%s3] sm:$0xff]
      %v305 = vld [vmem:[%s3 + $0x8] sm:$0xff]
      %v306 = vld [vmem:[%s3 + $0x10] sm:$0xff]
      %v307 = vld [vmem:[%s3 + $0x18] sm:$0xff]
      %v308 = vld [vmem:[%s3 + $0x20] sm:$0xff]
      %v309 = vld [vmem:[%s3 + $0x28] sm:$0xff]
      %v310 = vld [vmem:[%s3 + $0x30] sm:$0xff]
      %v311 = vld [vmem:[%s3 + $0x38] sm:$0xff]
      %v312 = vld [vmem:[%s3 + $0x40] sm:$0xff]
      %v313 = vld [vmem:[%s3 + $0x48] sm:$0xff]
      %v314 = vld [vmem:[%s3 + $0x50] sm:$0xff]
      %v315 = vld [vmem:[%s3 + $0x58] sm:$0xff]
      %317 = vset.pattern.permute.xlu0 0
      %318 = vperm.xlu0 %317, %v304
      %v319 = vpop.permute.xlu0 %318
      %322 = vset.pattern.permute.xlu0 0
      %323 = vperm.xlu0 %322, %v305
      %v324 = vpop.permute.xlu0 %323
      %327 = vset.pattern.permute.xlu0 0
      %328 = vperm.xlu0 %327, %v306
      %v329 = vpop.permute.xlu0 %328
      %332 = vset.pattern.permute.xlu0 0
      %333 = vperm.xlu0 %332, %v307
      %v334 = vpop.permute.xlu0 %333
      %337 = vset.pattern.permute.xlu0 0
      %338 = vperm.xlu0 %337, %v308
      %v339 = vpop.permute.xlu0 %338
      %342 = vset.pattern.permute.xlu0 0
      %343 = vperm.xlu0 %342, %v309
      %v344 = vpop.permute.xlu0 %343
      %347 = vset.pattern.permute.xlu0 0
      %348 = vperm.xlu0 %347, %v310
      %v349 = vpop.permute.xlu0 %348
      %352 = vset.pattern.permute.xlu0 0
      %353 = vperm.xlu0 %352, %v311
      %v354 = vpop.permute.xlu0 %353
      %357 = vset.pattern.permute.xlu0 0
      %358 = vperm.xlu0 %357, %v312
      %v359 = vpop.permute.xlu0 %358
      %362 = vset.pattern.permute.xlu0 0
      %363 = vperm.xlu0 %362, %v313
      %v364 = vpop.permute.xlu0 %363
      %367 = vset.pattern.permute.xlu0 0
      %368 = vperm.xlu0 %367, %v314
      %v369 = vpop.permute.xlu0 %368
      %372 = vset.pattern.permute.xlu0 0
      %373 = vperm.xlu0 %372, %v315
      %v374 = vpop.permute.xlu0 %373
      %v388 = vunpack.c.l.b16 %v292
      %v389 = vunpack.c.l.b16 %v293
      %v390 = vunpack.c.l.b16 %v294
      %v391 = vunpack.c.l.b16 %v295
      %v392 = vunpack.c.l.b16 %v296
      %v393 = vunpack.c.l.b16 %v297
      %v394 = vunpack.c.l.b16 %v298
      %v395 = vunpack.c.l.b16 %v299
      %v396 = vunpack.c.l.b16 %v300
      %v397 = vunpack.c.l.b16 %v301
      %v398 = vunpack.c.l.b16 %v302
      %v399 = vunpack.c.l.b16 %v303
      %v400 = vpack.c.b16 %v389, %v388
      %v401 = vpack.c.b16 %v391, %v390
      %v402 = vpack.c.b16 %v393, %v392
      %v403 = vpack.c.b16 %v395, %v394
      %v404 = vpack.c.b16 %v397, %v396
      %v405 = vpack.c.b16 %v399, %v398
      %vm406 = vcmask 392192
      %v408 = vsel %vm406, %v400, 0
      %v411 = vsel %vm406, %v401, 0
      %v414 = vsel %vm406, %v402, 0
      %v417 = vsel %vm406, %v403, 0
      %v420 = vsel %vm406, %v404, 0
      %v423 = vsel %vm406, %v405, 0
      %425 = vmatpush.bf16.msra.mxu0 0
      %426 = vmatpush.bf16.msra.mxu0 0
      %427 = vmatpush.bf16.msra.mxu0 0
      %428 = vmatpush.bf16.msra.mxu0 0
      %429 = vmatpush.bf16.msra.mxu0 0
      %430 = vmatpush.bf16.msra.mxu0 %v291
      %431 = vmatpush.bf16.msra.mxu0 %v290
      %432 = vmatpush.bf16.msra.mxu0 %v289
      %433 = vmatmul.bf16.gmra.mxu0 %v408
      %v434 = vpop.f32.mrf.mxu0
      %v435 = vadd.f32 %v319, %v434
      %v436 = vpop.f32.mrf.mxu0
      %v437 = vadd.f32 %v324, %v436
      %438 = vmatmul.bf16.gmra.mxu0 %v411
      %v439 = vpop.f32.mrf.mxu0
      %v440 = vadd.f32 %v329, %v439
      %v441 = vpop.f32.mrf.mxu0
      %v442 = vadd.f32 %v334, %v441
      %443 = vmatmul.bf16.gmra.mxu0 %v414
      %v444 = vpop.f32.mrf.mxu0
      %v445 = vadd.f32 %v339, %v444
      %v446 = vpop.f32.mrf.mxu0
      %v447 = vadd.f32 %v344, %v446
      %448 = vmatmul.bf16.gmra.mxu0 %v417
      %v449 = vpop.f32.mrf.mxu0
      %v450 = vadd.f32 %v349, %v449
      %v451 = vpop.f32.mrf.mxu0
      %v452 = vadd.f32 %v354, %v451
      %453 = vmatmul.bf16.gmra.mxu0 %v420
      %v454 = vpop.f32.mrf.mxu0
      %v455 = vadd.f32 %v359, %v454
      %v456 = vpop.f32.mrf.mxu0
      %v457 = vadd.f32 %v364, %v456
      %458 = vmatmul.bf16.gmra.mxu0 %v423
      %v459 = vpop.f32.mrf.mxu0
      %v460 = vadd.f32 %v369, %v459
      %v461 = vpop.f32.mrf.mxu0
      %v462 = vadd.f32 %v374, %v461
      %463 = vdwg.mxu0
      %464 = vst [vmem:[%s259] sm:$0xff] %v435
      %465 = vst [vmem:[%s259 + $0x8] sm:$0xff] %v437
      %466 = vst [vmem:[%s259 + $0x10] sm:$0xff] %v440
      %467 = vst [vmem:[%s259 + $0x18] sm:$0xff] %v442
      %468 = vst [vmem:[%s259 + $0x20] sm:$0xff] %v445
      %469 = vst [vmem:[%s259 + $0x28] sm:$0xff] %v447
      %470 = vst [vmem:[%s259 + $0x30] sm:$0xff] %v450
      %471 = vst [vmem:[%s259 + $0x38] sm:$0xff] %v452
      %472 = vst [vmem:[%s259 + $0x40] sm:$0xff] %v455
      %473 = vst [vmem:[%s259 + $0x48] sm:$0xff] %v457
      %474 = vst [vmem:[%s259 + $0x50] sm:$0xff] %v460
      %475 = vst [vmem:[%s259 + $0x58] sm:$0xff] %v462
      %p476 = scmp.lt.s32.totalorder %s19, 1
      %s477 = scalar_select %p476, %s19, 1
      %p478 = scmp.lt.s32.totalorder %s20, 0
      %s479 = scalar_select %p478, %s20, 0
      %s480 = smul.addr %s477, 12
      %s481 = sadd.s32 %s479, %s480
      %s482 = smul.addr %s481, 8
      %s483 = scalar_lea.vmem %s4, %s482
      // Predicated region
      $region37: #{canonical_encoder_forward.1} parent=35 // pred_check
        %p484 = pneg %p145
      $region38: #{canonical_encoder_forward.1} parent=35 // pred_check_branch
        %486 = sbr.rel (%p484) target = $region40
      $region39: #{canonical_encoder_forward.1} parent=35 // pred_region
        _
      $region40: #{canonical_encoder_forward.1} parent=35 // pred_fallthru
        _
    $region36: #{canonical_encoder_forward.1} parent=5 // pred_fallthru
      _
    %p487 = scmp.le.s32.totalorder 2, %s10
    // Predicated region
    $region41: #{canonical_encoder_forward.1} parent=5 // pred_check
      %p488 = pneg %p487
    $region42: #{canonical_encoder_forward.1} parent=5 // pred_check_branch
      %490 = sbr.rel (%p488) target = $region44
    $region43: #{canonical_encoder_forward.1} parent=5 // pred_region
      %s491 = ssub.s32 %s10, 2
      // Predicated region
      $region45: #{canonical_encoder_forward.1} parent=43 // pred_check
        %p492 = pneg %p151
      $region46: #{canonical_encoder_forward.1} parent=43 // pred_check_branch
        %494 = sbr.rel (%p492) target = $region48
      $region47: #{canonical_encoder_forward.1} parent=43 // pred_region
        %p495 = scmp.lt.s32.totalorder %s21, 1
        %s496 = scalar_select %p495, %s21, 1
        %p497 = scmp.lt.s32.totalorder %s22, 0
        %s498 = scalar_select %p497, %s22, 0
        %s499 = smul.addr %s496, 12
        %s500 = sadd.s32 %s498, %s499
        %s501 = smul.addr %s500, 8
        %s502 = scalar_lea.vmem %s4, %s501
      $region48: #{canonical_encoder_forward.1} parent=43 // pred_fallthru
        _
    $region44: #{canonical_encoder_forward.1} parent=5 // pred_fallthru
      _
  $region6: #{canonical_encoder_forward.1} parent=0 // loop_footer
    %s14 = sadd.s32 1, %s10
  $region7: #{canonical_encoder_forward.1} parent=0 // loop_footer_branch
    %9 = sbr.rel target = $region3
  $region8: #{canonical_encoder_forward.1} parent=0 // loop_exit
    _

</llo_original>
